<compile_context>
chip_gen: v5e
topology: v5e:2x2
jax: 0.10.0
libtpu: 0.0.40
codegen_flags: <defaults>
</compile_context>

<pallas_src>
import functools

import jax
import jax.numpy as jnp
from jax.experimental import pallas as pl
from jax.experimental.pallas import tpu as pltpu


_LOG_CLAMP = -100.0  # torch.nn.BCELoss clamps log terms at -100.


def _nbv_block_kernel(pred_ref, tgt_ref, out_ref, acc_ref, *,
                      lam_minus_1, binary_targets, valid_rows, block_rows,
                      accumulate):
    """One grid step over a (block_rows, lane) tile.

    Emits one scalar per block:
        block_loss = sum(bce) + (lambda - 1) * sum(bce where target != 0)
    Either written to its own (1, 1) SMEM output block (parallel partials) or
    accumulated in a persistent SMEM scratch and written once at the last
    grid step (accumulate=True).
    """
    p = pred_ref[...].astype(jnp.float32)

    if binary_targets:
        # target in {0, 1}: select the relevant probability first -> a single
        # log per element.  Target is only a mask, so never cast it.
        is_pos = tgt_ref[...] != 0
        x = jnp.where(is_pos, p, 1.0 - p)
        bce = -jnp.maximum(jnp.log(x), _LOG_CLAMP)
    else:
        # Exact BCELoss form (fractional targets allowed).  Keep the clamp
        # BEFORE the multiply so t==0 / t==1 never produce 0 * -inf.
        t = tgt_ref[...].astype(jnp.float32)
        is_pos = t != 0.0
        log_p = jnp.maximum(jnp.log(p), _LOG_CLAMP)
        log_1mp = jnp.maximum(jnp.log(1.0 - p), _LOG_CLAMP)
        bce = -(t * log_p + (1.0 - t) * log_1mp)

    # Ragged last block: rows past the valid extent contain unspecified data;
    # select() kills any NaN/Inf they produced.  Only emitted when needed.
    if valid_rows % block_rows != 0:
        row_ids = (pl.program_id(0) * block_rows
                   + jax.lax.broadcasted_iota(jnp.int32, bce.shape, 0))
        bce = jnp.where(row_ids < valid_rows, bce, 0.0)

    bce_pos = jnp.where(is_pos, bce, 0.0)
    block_loss = jnp.sum(bce) + lam_minus_1 * jnp.sum(bce_pos)

    if accumulate:
        @pl.when(pl.program_id(0) == 0)
        def _():
            acc_ref[0] = 0.0

        acc_ref[0] += block_loss

        @pl.when(pl.program_id(0) == pl.num_programs(0) - 1)
        def _():
            out_ref[0, 0] = acc_ref[0]
    else:
        out_ref[0, 0] = block_loss


def _round_up(x, m):
    return ((x + m - 1) // m) * m


def _cdiv(a, b):
    return -(-a // b)


def _as_free_2d_view(x):
    """Copy-free 2-D (rows, lane) view of a contiguous array."""
    total = x.size
    for lane in (512, 256, 128):          # lane-dense view when it is free
        if total % lane == 0:
            return x.reshape(total // lane, lane)
    if x.ndim >= 2:                        # natural trailing dim (exact HBM)
        return x.reshape(-1, x.shape[-1])
    return x.reshape(1, total)             # odd 1-D fallback


def nbv_loss(predictions, target, lambda_for_1, *, binary_targets=False,
             parallel_blocks=True, block_budget_bytes=2 << 20):
    """NBVLoss forward. `predictions` in (0, 1); returns a float32 scalar.

    binary_targets=True assumes targets are exactly {0, 1} (the NBV label
    contract) and uses one log per element; the default False keeps the exact
    two-log BCELoss form for arbitrary (soft) targets.
    parallel_blocks=False uses an in-kernel accumulator ("arbitrary" grid
    axis, no wrapper-side reduction) — preferable on single-TensorCore chips.
    """
    assert predictions.shape == target.shape, (predictions.shape, target.shape)
    assert predictions.size > 0

    p2 = _as_free_2d_view(predictions)
    t2 = target.reshape(p2.shape)
    rows, lane = p2.shape

    # Block-row budget: keep each double-buffered input block <= ~2 MiB so
    # 2 inputs x 2 pipeline buffers stay well inside every generation's
    # default scoped VMEM (v5e 16 MiB, v6e/v7x 32 MiB).
    itemsize = max(jnp.dtype(predictions.dtype).itemsize,
                   jnp.dtype(target.dtype).itemsize)
    row_bytes = _round_up(lane, 128) * itemsize
    rows_fit = max(8, (block_budget_bytes // row_bytes) // 8 * 8)

    if rows <= 8:
        block_rows = rows                       # single full block
    else:
        # >= 2 blocks whenever possible so both v7x TensorCores get work.
        block_rows = min(rows_fit, _round_up(_cdiv(rows, 2), 8))
    num_blocks = _cdiv(rows, block_rows)

    accumulate = (num_blocks > 1) and (not parallel_blocks)
    out_blocks = 1 if accumulate else num_blocks

    kernel = functools.partial(
        _nbv_block_kernel,
        lam_minus_1=float(lambda_for_1) - 1.0,
        binary_targets=binary_targets,
        valid_rows=rows,
        block_rows=block_rows,
        accumulate=accumulate)

    total = predictions.size
    cost = pl.CostEstimate(
        flops=10 * total,
        transcendentals=(1 if binary_targets else 2) * total,
        bytes_accessed=(total * jnp.dtype(predictions.dtype).itemsize
                        + total * jnp.dtype(target.dtype).itemsize
                        + out_blocks * 4))

    if accumulate:
        out_index_map = lambda i: (0, 0)
        semantics = ("arbitrary",)
    else:
        out_index_map = lambda i: (i, 0)
        semantics = ("parallel",)

    partials = pl.pallas_call(
        kernel,
        out_shape=jax.ShapeDtypeStruct((out_blocks, 1), jnp.float32),
        grid_spec=pltpu.PrefetchScalarGridSpec(
            num_scalar_prefetch=0,
            grid=(num_blocks,),
            in_specs=[
                pl.BlockSpec((block_rows, lane), lambda i: (i, 0)),
                pl.BlockSpec((block_rows, lane), lambda i: (i, 0)),
            ],
            out_specs=pl.BlockSpec((1, 1), out_index_map,
                                   memory_space=pltpu.MemorySpace.SMEM),
            scratch_shapes=[pltpu.SMEM((1,), jnp.float32)],
        ),
        compiler_params=pltpu.CompilerParams(dimension_semantics=semantics),
        cost_estimate=cost,
    )(p2, t2)

    if out_blocks == 1:
        return partials[0, 0]
    return jnp.sum(partials)


def nbv_loss_ref(predictions, target, lambda_for_1):
    """Pure-JAX reference mirroring the PyTorch double loop."""
    p = predictions.astype(jnp.float32)
    t = target.astype(jnp.float32)
    log_p = jnp.maximum(jnp.log(p), _LOG_CLAMP)
    log_1mp = jnp.maximum(jnp.log(1.0 - p), _LOG_CLAMP)
    bce = -(t * log_p + (1.0 - t) * log_1mp)
    s1 = jnp.sum(jnp.where(t != 0.0, bce, 0.0))
    s0 = jnp.sum(jnp.where(t == 0.0, bce, 0.0))
    return lambda_for_1 * s1 + s0


if __name__ == "__main__":
    key = jax.random.PRNGKey(0)
    ks = jax.random.split(key, 8)
    lambda_for_1 = 2.5  # module hyperparameter

    def check(pred, tgt, **kw):
        out = jax.block_until_ready(nbv_loss(pred, tgt, lambda_for_1, **kw))
        ref = jax.block_until_ready(nbv_loss_ref(pred, tgt, lambda_for_1))
        assert jnp.allclose(out, ref, rtol=1e-5, atol=1e-3), (kw, out, ref)
        return out

    # 1) NBV-sized problem: batch of 8 samples x 40 candidate views (1 block,
    #    natural (8, 40) view — no padding, no copies).
    p1 = jax.nn.sigmoid(jax.random.normal(ks[0], (8, 40), jnp.float32))
    t1 = jax.random.bernoulli(ks[1], p=0.3, shape=(8, 40)).astype(jnp.float32)
    check(p1, t1)                                # exact two-log BCE path
    check(p1, t1, binary_targets=True)           # single-log {0,1} fast path

    # 2) Lane-dense multi-block path with a ragged last block
    #    (rows=24, lane=512 -> block_rows=16, 2 blocks, mask on the tail).
    p2 = jax.nn.sigmoid(jax.random.normal(ks[2], (24, 512), jnp.float32))
    t2 = jax.random.bernoulli(ks[3], p=0.3, shape=(24, 512)).astype(jnp.float32)
    check(p2, t2, binary_targets=True)                          # parallel partials
    check(p2, t2, binary_targets=True, parallel_blocks=False)   # SMEM accumulator

    # 3) Last dim not a multiple of 128: natural (40, 77) view, multi-block,
    #    ragged tail — still no padded HBM copy.
    p3 = jax.nn.sigmoid(jax.random.normal(ks[4], (40, 77), jnp.float32))
    t3 = jax.random.bernoulli(ks[5], p=0.3, shape=(40, 77)).astype(jnp.float32)
    check(p3, t3)

    # 4) bf16 inputs: the f32 cast happens inside the kernel.
    p4 = jax.nn.sigmoid(jax.random.normal(ks[6], (8, 40), jnp.float32)).astype(jnp.bfloat16)
    t4 = jax.random.bernoulli(ks[7], p=0.3, shape=(8, 40)).astype(jnp.bfloat16)
    check(p4, t4, binary_targets=True)

    print("KERNEL_OK")
</pallas_src>

<mosaic_0001>
module attributes {stable_mosaic.version = 11 : i64} {
  func.func @_nbv_block_kernel(%arg0: i32, %arg1: memref<8x40xf32, #tpu.memory_space<vmem>>, %arg2: memref<8x40xf32, #tpu.memory_space<vmem>>, %arg3: memref<1x1xf32, #tpu.memory_space<smem>>, %arg4: memref<1xf32, #tpu.memory_space<smem>>) attributes {dimension_semantics = [#tpu.dimension_semantics<parallel>], iteration_bounds = array<i64: 1>, scalar_prefetch = 0 : i64, scratch_operands = 1 : i64, tpu.core_type = #tpu.core_type<tc>, window_params = [{transform_indices = @transform_0, window_bounds = array<i64: 8, 40>}, {transform_indices = @transform_1, window_bounds = array<i64: 8, 40>}, {transform_indices = @transform_2, window_bounds = array<i64: 1, 1>}]} {
    %c0 = arith.constant 0 : index
    %c0_0 = arith.constant 0 : index
    %0 = vector.load %arg1[%c0, %c0_0] : memref<8x40xf32, #tpu.memory_space<vmem>>, vector<8x40xf32>
    %c0_1 = arith.constant 0 : index
    %c0_2 = arith.constant 0 : index
    %1 = vector.load %arg2[%c0_1, %c0_2] : memref<8x40xf32, #tpu.memory_space<vmem>>, vector<8x40xf32>
    %cst = arith.constant 0.000000e+00 : f32
    %2 = vector.broadcast %cst : f32 to vector<8x40xf32>
    %3 = arith.cmpf one, %1, %2 : vector<8x40xf32>
    %4 = math.log %0 : vector<8x40xf32>
    %cst_3 = arith.constant -1.000000e+02 : f32
    %5 = vector.broadcast %cst_3 : f32 to vector<8x40xf32>
    %6 = arith.maximumf %4, %5 : vector<8x40xf32>
    %cst_4 = arith.constant 1.000000e+00 : f32
    %7 = vector.broadcast %cst_4 : f32 to vector<8x40xf32>
    %8 = arith.subf %7, %0 : vector<8x40xf32>
    %9 = math.log %8 : vector<8x40xf32>
    %cst_5 = arith.constant -1.000000e+02 : f32
    %10 = vector.broadcast %cst_5 : f32 to vector<8x40xf32>
    %11 = arith.maximumf %9, %10 : vector<8x40xf32>
    %12 = arith.mulf %1, %6 : vector<8x40xf32>
    %cst_6 = arith.constant 1.000000e+00 : f32
    %13 = vector.broadcast %cst_6 : f32 to vector<8x40xf32>
    %14 = arith.subf %13, %1 : vector<8x40xf32>
    %15 = arith.mulf %14, %11 : vector<8x40xf32>
    %16 = arith.addf %12, %15 : vector<8x40xf32>
    %cst_7 = arith.constant 0.000000e+00 : f32
    %17 = vector.broadcast %cst_7 : f32 to vector<8x40xf32>
    %18 = arith.subf %17, %16 : vector<8x40xf32>
    %cst_8 = arith.constant 0.000000e+00 : f32
    %19 = vector.broadcast %cst_8 : f32 to vector<8x40xf32>
    %20 = arith.select %3, %18, %19 : vector<8x40xi1>, vector<8x40xf32>
    %21 = vector.shape_cast %18 : vector<8x40xf32> to vector<1x8x40xf32>
    %cst_9 = arith.constant dense<0.000000e+00> : vector<1xf32>
    %22 = vector.multi_reduction <add>, %21, %cst_9 [1, 2] : vector<1x8x40xf32> to vector<1xf32>
    %23 = vector.shape_cast %22 : vector<1xf32> to vector<1x1x1xf32>
    %24 = vector.extract %23[0, 0, 0] : f32 from vector<1x1x1xf32>
    %25 = vector.shape_cast %20 : vector<8x40xf32> to vector<1x8x40xf32>
    %cst_10 = arith.constant dense<0.000000e+00> : vector<1xf32>
    %26 = vector.multi_reduction <add>, %25, %cst_10 [1, 2] : vector<1x8x40xf32> to vector<1xf32>
    %27 = vector.shape_cast %26 : vector<1xf32> to vector<1x1x1xf32>
    %28 = vector.extract %27[0, 0, 0] : f32 from vector<1x1x1xf32>
    %cst_11 = arith.constant 1.500000e+00 : f32
    %29 = arith.mulf %cst_11, %28 : f32
    %30 = arith.addf %24, %29 : f32
    %c0_12 = arith.constant 0 : index
    %c0_13 = arith.constant 0 : index
    %31 = memref.load %arg3[%c0_12, %c0_13] : memref<1x1xf32, #tpu.memory_space<smem>>
    memref.store %30, %arg3[%c0_12, %c0_13] : memref<1x1xf32, #tpu.memory_space<smem>>
    return
  }
  func.func @transform_0(%arg0: i32) -> (i32, i32) {
    %c0_i32 = arith.constant 0 : i32
    %c0_i32_0 = arith.constant 0 : i32
    return %arg0, %c0_i32 : i32, i32
  }
  func.func @transform_1(%arg0: i32) -> (i32, i32) {
    %c0_i32 = arith.constant 0 : i32
    %c0_i32_0 = arith.constant 0 : i32
    return %arg0, %c0_i32 : i32, i32
  }
  func.func @transform_2(%arg0: i32) -> (i32, i32) {
    %c0_i32 = arith.constant 0 : i32
    %c0_i32_0 = arith.constant 0 : i32
    return %arg0, %c0_i32 : i32, i32
  }
}

</mosaic_0001>

<llo_original>
// kernel: tpu_custom_call.1
$region0: #{tpu_custom_call.1}
  #allocation0 [shape = 'u32[]', space=smem, size = 0x4, offset = 0x4, fixed_abs, tag = 'smem constant byte address 0x4 - core index']
  #allocation1 [shape = 'u32[72,128]{1,0:T(1,128)}', space=vmem, size = 0x9000, scoped, tag = 'internal scratch']
  #allocation2 [shape = 'f32[1]{0:T(128)}', space=smem, size = 0x200, scoped, tag = 'scratch operand']
  %s0 = inlined_call_operand.hbm [shape: f32[8,40], index: 0, kind: input, shape index: {}]
  %s1 = inlined_call_operand.hbm [shape: f32[8,40], index: 1, kind: input, shape index: {}]
  %s2 = inlined_call_operand.hbm [shape: f32[1,1], index: 2, kind: output, shape index: {}]
  %s3 = sld [smem:[#allocation0]]
  $region26: #{tpu_custom_call.1} parent=0
    _
  %s5 = ssub.s32 1, %s3
  %s6 = scalar_select 0, %s5, %s3
  $region1: #{tpu_custom_call.1} parent=0
    #allocation3 [shape = 'u8[4096]{0}', space=vmem, size = 0x1000, scoped, tag = 'input window, operand 0, single buffered']
    #allocation4 [shape = 's32[1]{0}', space=sflag, size = 0x4, scoped, tag = 'scoped memory for tpu_custom_call.1']
    #allocation5 [shape = 's32[1]{0}', space=sflag, size = 0x4, scoped, tag = 'scoped memory for tpu_custom_call.1']
    #allocation6 [shape = 'u8[4096]{0}', space=vmem, size = 0x1000, scoped, tag = 'input window, operand 1, single buffered']
    #allocation7 [shape = 's32[1]{0}', space=sflag, size = 0x4, scoped, tag = 'scoped memory for tpu_custom_call.1']
    #allocation8 [shape = 'u8[512]{0}', space=smem, size = 0x200, scoped, tag = 'output window, operand 0, single buffered']
    %7 = vsyncpa [#allocation4], 0
    %8 = vsyncpa [#allocation7], 0
    %9 = vsyncpa [#allocation5], 0
    // Predicated region
    $region2: #{tpu_custom_call.1} parent=1 // pred_check
      _
    $region3: #{tpu_custom_call.1} parent=1 // pred_check_branch
      %11 = sbr.rel (0) target = $region5
    $region4: #{tpu_custom_call.1} parent=1 // pred_region
      %13 = vsyncadd [#allocation4], 0
      %s15 = sshll.u32 %s0, 4
      %s16 = int_to_ptr.hbm [resolvable:$true] %s15
      %s17 = sshll.u32 [#allocation3], 4
      %s18 = int_to_ptr.vmem [resolvable:$true] %s17
      %20 = dma.hbm_to_vmem [thread:$0]  %s16, 128, %s18, [#allocation4]
    $region5: #{tpu_custom_call.1} parent=1 // pred_fallthru
      _
    // Predicated region
    $region6: #{tpu_custom_call.1} parent=1 // pred_check
      _
    $region7: #{tpu_custom_call.1} parent=1 // pred_check_branch
      %22 = sbr.rel (0) target = $region9
    $region8: #{tpu_custom_call.1} parent=1 // pred_region
      %24 = vsyncadd [#allocation7], 0
      %s26 = sshll.u32 %s1, 4
      %s27 = int_to_ptr.hbm [resolvable:$true] %s26
      %s28 = sshll.u32 [#allocation6], 4
      %s29 = int_to_ptr.vmem [resolvable:$true] %s28
      %31 = dma.hbm_to_vmem [thread:$0]  %s27, 128, %s29, [#allocation7]
    $region9: #{tpu_custom_call.1} parent=1 // pred_fallthru
      _
    // Predicated region
    $region10: #{tpu_custom_call.1} parent=1 // pred_check
      _
    $region11: #{tpu_custom_call.1} parent=1 // pred_check_branch
      %33 = sbr.rel (0) target = $region13
    $region12: #{tpu_custom_call.1} parent=1 // pred_region
      %35 = dma.done [#allocation4], 128
    $region13: #{tpu_custom_call.1} parent=1 // pred_fallthru
      _
    // Predicated region
    $region14: #{tpu_custom_call.1} parent=1 // pred_check
      _
    $region15: #{tpu_custom_call.1} parent=1 // pred_check_branch
      %37 = sbr.rel (0) target = $region17
    $region16: #{tpu_custom_call.1} parent=1 // pred_region
      %39 = dma.done [#allocation7], 128
    $region17: #{tpu_custom_call.1} parent=1 // pred_fallthru
      _
    %v40 = vld [vmem:[#allocation3] sm:$0xff]
    %v41 = vld [vmem:[#allocation6] sm:$0xff]
    %vm42 = vcmp.ne.f32.partialorder %v41, 0.0
    %v43 = vlog2.pop %v40
    %v44 = vmul.f32 %v43, 0.6931472
    %v45 = vmax.f32 %v44, -100.0
    %v46 = vsub.f32 1.0, %v40
    %v47 = vlog2.pop %v46
    %v48 = vmul.f32 %v47, 0.6931472
    %v49 = vmax.f32 %v48, -100.0
    %v50 = vmul.f32 %v41, %v45
    %v51 = vsub.f32 1.0, %v41
    %v52 = vmul.f32 %v51, %v49
    %v53 = vadd.f32 %v50, %v52
    %v54 = vsub.f32 0.0, %v53
    %v55 = vsel %vm42, %v54, 0.0
    %vm56 = vcmask 326656
    %v57 = vsel %vm56, %v54, 0.0
    %58 = vadd.xlane.f32.xlu0 %v57
    %v59 = vpop.xlane.xlu0 %58
    %v60 = vrot.slane %v59, 4
    %v61 = vadd.f32 %v59, %v60
    %v62 = vrot.slane %v61, 2
    %v63 = vadd.f32 %v61, %v62
    %v64 = vrot.slane %v63, 1
    %v65 = vadd.f32 %v63, %v64
    %s66 = vtos %v65
    %v67 = vsel %vm56, %v55, 0.0
    %68 = vadd.xlane.f32.xlu0 %v67
    %v69 = vpop.xlane.xlu0 %68
    %v70 = vrot.slane %v69, 4
    %v71 = vadd.f32 %v69, %v70
    %v72 = vrot.slane %v71, 2
    %v73 = vadd.f32 %v71, %v72
    %v74 = vrot.slane %v73, 1
    %v75 = vadd.f32 %v73, %v74
    %s76 = vtos %v75
    %s77 = smul.f32 %s76, 1.5
    %s78 = sadd.f32 %s66, %s77
    %s79 = scalar_lea.smem [#allocation8], 0
    %80 = sst [smem:[%s79]] %s78
    // Predicated region
    $region18: #{tpu_custom_call.1} parent=1 // pred_check
      _
    $region19: #{tpu_custom_call.1} parent=1 // pred_check_branch
      %82 = sbr.rel (0) target = $region21
    $region20: #{tpu_custom_call.1} parent=1 // pred_region
      %84 = vsyncadd [#allocation5], 0
      %s86 = sshll.u32 %s2, 4
      %s87 = int_to_ptr.hbm [resolvable:$true] %s86
      %89 = dma.smem_to_hbm [#allocation8], 16, %s87, [#allocation5]
    $region21: #{tpu_custom_call.1} parent=1 // pred_fallthru
      _
    // Predicated region
    $region22: #{tpu_custom_call.1} parent=1 // pred_check
      _
    $region23: #{tpu_custom_call.1} parent=1 // pred_check_branch
      %91 = sbr.rel (0) target = $region25
    $region24: #{tpu_custom_call.1} parent=1 // pred_region
      %93 = dma.done [#allocation5], 16
    $region25: #{tpu_custom_call.1} parent=1 // pred_fallthru
      _
    %94 = sfence
    %95 = vsyncpa [#allocation4], 1
    %96 = vsyncpa [#allocation7], 1
    %97 = vsyncpa [#allocation5], 1

</llo_original>
